<compile_context>
chip_gen: v6e
topology: v6e:2x2x1
jax: 0.10.0
libtpu: 0.0.40
codegen_flags: <defaults>
</compile_context>

<pallas_src>
import functools

import jax
import jax.numpy as jnp
from jax.experimental import pallas as pl
from jax.experimental.pallas import tpu as pltpu


def _group_dropout_kernel(mask_ref, x_ref, o_ref, *, scale):
    # mask_ref: (1, TS, 1) f32 keep mask in {0., 1.}
    # x_ref / o_ref: (1, TS, H)
    keep = mask_ref[...] * scale                                  # f32: {0, 1/(1-p)^2}
    o_ref[...] = (x_ref[...].astype(jnp.float32) * keep).astype(o_ref.dtype)


def group_dropout(x, key, *, p=0.0, group_size=1, training=True, block_seq=None):
    """JAX/Pallas equivalent of GroupDropout.forward."""
    if p == 0.0 or not training:
        return x

    B, S, H = x.shape
    num_groups = (S + group_size - 1) // group_size

    # Per-(batch, group) keep decisions; expansion to per-token is tiny glue
    # (matches torch: ones -> F.dropout -> repeat(group_size) -> view -> [:S]).
    keep_groups = jax.random.bernoulli(key, 1.0 - p, (B, num_groups)).astype(jnp.float32)
    keep_seq = jnp.repeat(keep_groups, group_size, axis=1)[:, :S]      # (B, S)
    keep_seq = keep_seq[:, :, None]                                    # (B, S, 1)

    # F.dropout scales by 1/(1-p); the module divides by (1-p) again.
    scale = 1.0 / ((1.0 - p) * (1.0 - p))

    # ---- choose the sequence tile size TS -------------------------------
    itemsize = jnp.dtype(x.dtype).itemsize
    sub = max(8, 32 // itemsize)            # sublane packing: 8 f32, 16 bf16, 32 int8
    if block_seq is None:
        target_block_bytes = 2 * 1024 * 1024            # per x block (double-buffered in+out ~8 MiB)
        ts = target_block_bytes // max(1, H * itemsize)
        ts = min(ts, 512)                               # ~85%+ of HBM roofline per tile sweep
        ts = max((ts // sub) * sub, sub)                # keep sublane alignment
    else:
        ts = block_seq
    if ts >= S:
        ts = S                                          # full-extent block is always legal
    num_s_tiles = (S + ts - 1) // ts

    kernel = functools.partial(_group_dropout_kernel, scale=scale)
    return pl.pallas_call(
        kernel,
        out_shape=jax.ShapeDtypeStruct((B, S, H), x.dtype),
        grid_spec=pltpu.PrefetchScalarGridSpec(
            num_scalar_prefetch=0,
            grid=(B, num_s_tiles),
            in_specs=[
                pl.BlockSpec((1, ts, 1), lambda b, s: (b, s, 0)),   # keep mask
                pl.BlockSpec((1, ts, H), lambda b, s: (b, s, 0)),   # x
            ],
            out_specs=pl.BlockSpec((1, ts, H), lambda b, s: (b, s, 0)),
        ),
        compiler_params=pltpu.CompilerParams(
            dimension_semantics=("parallel", "parallel")),
    )(keep_seq, x)


if __name__ == "__main__":
    def ref_group_dropout(x, key, p, group_size):
        B, S, H = x.shape
        ng = (S + group_size - 1) // group_size
        kg = jax.random.bernoulli(key, 1.0 - p, (B, ng)).astype(jnp.float32)
        ks = jnp.repeat(kg, group_size, axis=1)[:, :S]
        return (x.astype(jnp.float32)
                * (ks * (1.0 / (1.0 - p) ** 2))[:, :, None]).astype(x.dtype)

    key = jax.random.PRNGKey(0)
    kx, km = jax.random.split(key)

    # Small demo shape implied by the module's (B, S, H) forward.
    B, S, H = 2, 8, 32
    p, group_size = 0.5, 4
    x = jax.random.normal(kx, (B, S, H), dtype=jnp.float32)

    y = jax.block_until_ready(
        group_dropout(x, km, p=p, group_size=group_size, training=True))
    ref = ref_group_dropout(x, km, p, group_size)
    assert jnp.allclose(y, ref, atol=1e-5, rtol=1e-5), "training path mismatch"

    # Multi-tile path: sequence split into several (1, TS, H) blocks, with
    # groups that are NOT tile-aligned (group_size=5, TS=8).
    B2, S2, H2 = 2, 24, 32
    p2, gs2 = 0.25, 5
    x2 = jax.random.normal(kx, (B2, S2, H2), dtype=jnp.float32)
    y2 = jax.block_until_ready(
        group_dropout(x2, km, p=p2, group_size=gs2, training=True, block_seq=8))
    ref2 = ref_group_dropout(x2, km, p2, gs2)
    assert jnp.allclose(y2, ref2, atol=1e-5, rtol=1e-5), "tiled path mismatch"

    # Eval / p==0 paths are the identity (matches the PyTorch early return).
    y_eval = group_dropout(x, km, p=p, group_size=group_size, training=False)
    assert jnp.allclose(jax.block_until_ready(y_eval), x), "eval path mismatch"
    y_p0 = group_dropout(x, km, p=0.0, group_size=group_size, training=True)
    assert jnp.allclose(jax.block_until_ready(y_p0), x), "p=0 path mismatch"

    print("KERNEL_OK")
</pallas_src>

<mosaic_0001>
module attributes {stable_mosaic.version = 11 : i64} {
  func.func @_group_dropout_kernel(%arg0: i32, %arg1: i32, %arg2: memref<1x8x1xf32, #tpu.memory_space<vmem>>, %arg3: memref<1x8x32xf32, #tpu.memory_space<vmem>>, %arg4: memref<1x8x32xf32, #tpu.memory_space<vmem>>) attributes {dimension_semantics = [#tpu.dimension_semantics<parallel>, #tpu.dimension_semantics<parallel>], iteration_bounds = array<i64: 2, 1>, scalar_prefetch = 0 : i64, scratch_operands = 0 : i64, tpu.core_type = #tpu.core_type<tc>, window_params = [{transform_indices = @transform_0, window_bounds = array<i64: 1, 8, 1>}, {transform_indices = @transform_1, window_bounds = array<i64: 1, 8, 32>}, {transform_indices = @transform_2, window_bounds = array<i64: 1, 8, 32>}]} {
    %c0 = arith.constant 0 : index
    %c0_0 = arith.constant 0 : index
    %c0_1 = arith.constant 0 : index
    %0 = vector.load %arg2[%c0, %c0_0, %c0_1] : memref<1x8x1xf32, #tpu.memory_space<vmem>>, vector<1x8x1xf32>
    %cst = arith.constant 4.000000e+00 : f32
    %1 = vector.broadcast %cst : f32 to vector<1x8x1xf32>
    %2 = arith.mulf %0, %1 : vector<1x8x1xf32>
    %c0_2 = arith.constant 0 : index
    %c0_3 = arith.constant 0 : index
    %c0_4 = arith.constant 0 : index
    %3 = vector.load %arg3[%c0_2, %c0_3, %c0_4] : memref<1x8x32xf32, #tpu.memory_space<vmem>>, vector<1x8x32xf32>
    %4 = vector.broadcast %2 : vector<1x8x1xf32> to vector<1x8x32xf32>
    %5 = arith.mulf %3, %4 : vector<1x8x32xf32>
    %c0_5 = arith.constant 0 : index
    %c0_6 = arith.constant 0 : index
    %c0_7 = arith.constant 0 : index
    %6 = vector.load %arg4[%c0_5, %c0_6, %c0_7] : memref<1x8x32xf32, #tpu.memory_space<vmem>>, vector<1x8x32xf32>
    tpu.vector_store %arg4[%c0_5, %c0_6, %c0_7], %5 {strides = array<i32>} : memref<1x8x32xf32, #tpu.memory_space<vmem>>, vector<1x8x32xf32>,
    return
  }
  func.func @transform_0(%arg0: i32, %arg1: i32) -> (i32, i32, i32) {
    %c0_i32 = arith.constant 0 : i32
    %c0_i32_0 = arith.constant 0 : i32
    return %arg0, %arg1, %c0_i32 : i32, i32, i32
  }
  func.func @transform_1(%arg0: i32, %arg1: i32) -> (i32, i32, i32) {
    %c0_i32 = arith.constant 0 : i32
    %c0_i32_0 = arith.constant 0 : i32
    return %arg0, %arg1, %c0_i32 : i32, i32, i32
  }
  func.func @transform_2(%arg0: i32, %arg1: i32) -> (i32, i32, i32) {
    %c0_i32 = arith.constant 0 : i32
    %c0_i32_0 = arith.constant 0 : i32
    return %arg0, %arg1, %c0_i32 : i32, i32, i32
  }
}

</mosaic_0001>

<llo_original>
// kernel: tpu_custom_call.1
$region0: #{tpu_custom_call.1}
  #allocation0 [shape = 'u32[]', space=smem, size = 0x4, offset = 0x4, fixed_abs, tag = 'smem constant byte address 0x4 - core index']
  #allocation1 [shape = 'u32[144,128]{1,0:T(1,128)}', space=vmem, size = 0x12000, scoped, tag = 'internal scratch']
  %s0 = inlined_call_operand.vmem [shape: f32[2,8,1], index: 0, kind: input, shape index: {}]
  %s1 = inlined_call_operand.vmem [shape: f32[2,8,32], index: 1, kind: input, shape index: {}]
  %s2 = inlined_call_operand.hbm [shape: f32[2,8,32], index: 2, kind: output, shape index: {}]
  %s3 = sld [smem:[#allocation0]]
  $region41: #{tpu_custom_call.1} parent=0
    _
  %s5 = ssub.s32 1, %s3
  %s6 = scalar_select 0, %s5, %s3
  $region1: #{tpu_custom_call.1} parent=0
    #allocation2 [shape = 'u8[8192]{0}', space=vmem, size = 0x2000, scoped, tag = 'output window, operand 0']
    #allocation3 [shape = 's32[2]{0}', space=sflag, size = 0x8, scoped, tag = 'scoped memory for tpu_custom_call.1']
    %7 = vsyncpa [#allocation3], 0
    %s8 = scalar_lea.sflag [#allocation3], 1
    %9 = vsyncpa %s8, 0
    loop: start=0, step=1, limit=4
    $region2: #{tpu_custom_call.1} parent=1 // loop_pre_header
      _
    $region3: #{tpu_custom_call.1} parent=1 // loop_header
      %s11 = sphi 0, %s15
      %p12 = scmp.ge.s32.totalorder %s11, 4
      %s18 = sphi 0, %s30
      %s19 = sphi 0, %s26
      %s20 = sphi 0, %s18
      %s21 = sphi 0, %s19
      %s22 = sphi 0, %s20
      %s23 = sphi 0, %s21
      %s35 = sphi 0, %s37
      %s38 = sphi 0, %s35
      %s39 = sphi 0, %s38
      %s55 = sphi 0, %s39
      %s63 = sphi 0, %s65
      %s66 = sphi 0, %s63
      %s67 = sphi 0, %s66
      %s83 = sphi 0, %s67
      %s91 = sphi 0, %s93
      %s94 = sphi 0, %s91
      %s95 = sphi 0, %s94
      %s111 = sphi 0, %s95
    $region4: #{tpu_custom_call.1} parent=1 // loop_header_branch
      %14 = sbr.rel (%p12) target = $region8
    $region5: #{tpu_custom_call.1} parent=1 // loop_body
      %s16 = ssub.s32 %s11, 1
      %s17 = ssub.s32 %s11, 2
      %s24 = sadd.s32 1, %s19
      %p25 = scmp.ge.s32.totalorder %s24, 1
      %s26 = scalar_select %p25, 0, %s24
      %s27 = sadd.s32 1, %s18
      %s28 = scalar_select %p25, %s27, %s18
      %p29 = scmp.ge.s32.totalorder %s28, 2
      %s30 = scalar_select %p29, 0, %s28
      %s31 = ssub.s32 %s18, %s30
      %s32 = ssub.s32 %s19, %s26
      %s33 = sor.u32 %s31, %s32
      %p34 = scmp.eq.s32.totalorder %s33, 0
      %s36 = sadd.s32 %s35, 1
      %s37 = scalar_select %p34, %s35, %s36
      %p40 = pneg %p34
      %p41 = scmp.eq.s32.totalorder %s11, 1
      %p42 = por %p40, %p41
      %p43 = scmp.ne.s32.totalorder %s35, %s38
      %p44 = scmp.eq.s32.totalorder %s11, 0
      %p45 = por %p43, %p44
      %p46 = scmp.ne.s32.totalorder %s35, %s38
      %p47 = scmp.eq.s32.totalorder %s16, 1
      %p48 = por %p46, %p47
      %p49 = scmp.ne.s32.totalorder %s38, %s39
      %p50 = scmp.eq.s32.totalorder %s16, 0
      %p51 = por %p49, %p50
      %p52 = scmp.ne.s32.totalorder %s38, %s39
      %p53 = scmp.eq.s32.totalorder %s17, 1
      %p54 = por %p52, %p53
      %p56 = scmp.ne.s32.totalorder %s39, %s55
      %p57 = scmp.eq.s32.totalorder %s17, 0
      %p58 = por %p56, %p57
      %s59 = ssub.s32 %s18, %s30
      %s60 = ssub.s32 %s19, %s26
      %s61 = sor.u32 %s59, %s60
      %p62 = scmp.eq.s32.totalorder %s61, 0
      %s64 = sadd.s32 %s63, 1
      %s65 = scalar_select %p62, %s63, %s64
      %p68 = pneg %p62
      %p69 = scmp.eq.s32.totalorder %s11, 1
      %p70 = por %p68, %p69
      %p71 = scmp.ne.s32.totalorder %s63, %s66
      %p72 = scmp.eq.s32.totalorder %s11, 0
      %p73 = por %p71, %p72
      %p74 = scmp.ne.s32.totalorder %s63, %s66
      %p75 = scmp.eq.s32.totalorder %s16, 1
      %p76 = por %p74, %p75
      %p77 = scmp.ne.s32.totalorder %s66, %s67
      %p78 = scmp.eq.s32.totalorder %s16, 0
      %p79 = por %p77, %p78
      %p80 = scmp.ne.s32.totalorder %s66, %s67
      %p81 = scmp.eq.s32.totalorder %s17, 1
      %p82 = por %p80, %p81
      %p84 = scmp.ne.s32.totalorder %s67, %s83
      %p85 = scmp.eq.s32.totalorder %s17, 0
      %p86 = por %p84, %p85
      %s87 = ssub.s32 %s18, %s30
      %s88 = ssub.s32 %s19, %s26
      %s89 = sor.u32 %s87, %s88
      %p90 = scmp.eq.s32.totalorder %s89, 0
      %s92 = sadd.s32 %s91, 1
      %s93 = scalar_select %p90, %s91, %s92
      %p96 = pneg %p90
      %p97 = scmp.eq.s32.totalorder %s11, 1
      %p98 = por %p96, %p97
      %p99 = scmp.ne.s32.totalorder %s91, %s94
      %p100 = scmp.eq.s32.totalorder %s11, 0
      %p101 = por %p99, %p100
      %p102 = scmp.ne.s32.totalorder %s91, %s94
      %p103 = scmp.eq.s32.totalorder %s16, 1
      %p104 = por %p102, %p103
      %p105 = scmp.ne.s32.totalorder %s94, %s95
      %p106 = scmp.eq.s32.totalorder %s16, 0
      %p107 = por %p105, %p106
      %p108 = scmp.ne.s32.totalorder %s94, %s95
      %p109 = scmp.eq.s32.totalorder %s17, 1
      %p110 = por %p108, %p109
      %p112 = scmp.ne.s32.totalorder %s95, %s111
      %p113 = scmp.eq.s32.totalorder %s17, 0
      %p114 = por %p112, %p113
      %p115 = scmp.le.s32.totalorder 1, %s11
      %p116 = scmp.lt.s32.totalorder %s11, 3
      %p117 = pnand %p115, %p116
      %p118 = pneg %p117
      // Predicated region
      $region9: #{tpu_custom_call.1} parent=5 // pred_check
        _
      $region10: #{tpu_custom_call.1} parent=5 // pred_check_branch
        %120 = sbr.rel (%p117) target = $region12
      $region11: #{tpu_custom_call.1} parent=5 // pred_region
        %s121 = ssub.s32 %s11, 1
      $region12: #{tpu_custom_call.1} parent=5 // pred_fallthru
        _
      %p122 = scmp.lt.s32.totalorder %s11, 2
      // Predicated region
      $region13: #{tpu_custom_call.1} parent=5 // pred_check
        %p123 = pneg %p122
      $region14: #{tpu_custom_call.1} parent=5 // pred_check_branch
        %125 = sbr.rel (%p123) target = $region16
      $region15: #{tpu_custom_call.1} parent=5 // pred_region
        // Predicated region
        $region17: #{tpu_custom_call.1} parent=15 // pred_check
          %p126 = pneg %p45
        $region18: #{tpu_custom_call.1} parent=15 // pred_check_branch
          %128 = sbr.rel (%p126) target = $region20
        $region19: #{tpu_custom_call.1} parent=15 // pred_region
          %p129 = scmp.lt.s32.totalorder %s18, 1
          %s130 = scalar_select %p129, %s18, 1
          %p131 = scmp.lt.s32.totalorder %s19, 0
          %s132 = scalar_select %p131, %s19, 0
          %s133 = sadd.s32 %s132, %s130
          %s134 = smul.addr %s133, 8
          %s135 = scalar_lea.vmem %s0, %s134
        $region20: #{tpu_custom_call.1} parent=15 // pred_fallthru
          _
        // Predicated region
        $region21: #{tpu_custom_call.1} parent=15 // pred_check
          %p136 = pneg %p73
        $region22: #{tpu_custom_call.1} parent=15 // pred_check_branch
          %138 = sbr.rel (%p136) target = $region24
        $region23: #{tpu_custom_call.1} parent=15 // pred_region
          %p139 = scmp.lt.s32.totalorder %s18, 1
          %s140 = scalar_select %p139, %s18, 1
          %p141 = scmp.lt.s32.totalorder %s19, 0
          %s142 = scalar_select %p141, %s19, 0
          %s143 = sadd.s32 %s142, %s140
          %s144 = smul.addr %s143, 8
          %s145 = scalar_lea.vmem %s1, %s144
        $region24: #{tpu_custom_call.1} parent=15 // pred_fallthru
          _
      $region16: #{tpu_custom_call.1} parent=5 // pred_fallthru
        _
      %p146 = scmp.le.s32.totalorder 1, %s11
      %p147 = scmp.lt.s32.totalorder %s11, 3
      %p148 = pnand %p146, %p147
      %p149 = pneg %p148
      // Predicated region
      $region25: #{tpu_custom_call.1} parent=5 // pred_check
        _
      $region26: #{tpu_custom_call.1} parent=5 // pred_check_branch
        %151 = sbr.rel (%p148) target = $region28
      $region27: #{tpu_custom_call.1} parent=5 // pred_region
        %s152 = ssub.s32 %s11, 1
        %p153 = scmp.lt.s32.totalorder %s20, 1
        %s154 = scalar_select %p153, %s20, 1
        %p155 = scmp.lt.s32.totalorder %s21, 0
        %s156 = scalar_select %p155, %s21, 0
        %s157 = sadd.s32 %s156, %s154
        %s158 = smul.addr %s157, 8
        %s159 = scalar_lea.vmem %s0, %s158
        %p160 = pneg %p51
        %p161 = pneg %p48
        %p162 = scmp.lt.s32.totalorder %s20, 1
        %s163 = scalar_select %p162, %s20, 1
        %p164 = scmp.lt.s32.totalorder %s21, 0
        %s165 = scalar_select %p164, %s21, 0
        %s166 = sadd.s32 %s165, %s163
        %s167 = smul.addr %s166, 8
        %s168 = scalar_lea.vmem %s1, %s167
        %p169 = pneg %p79
        %p170 = pneg %p76
        %p171 = pneg %p107
        %p172 = pneg %p104
        %s173 = sand.u32 %s94, 1
        %s174 = scalar_lea.sflag [#allocation3], %s173
        %s175 = sand.u32 %s94, 1
        %s176 = smul.addr %s175, 8
        %s177 = scalar_lea.vmem [#allocation2], %s176
        %p178 = scmp.lt.s32.totalorder %s20, 1
        %s179 = scalar_select %p178, %s20, 1
        %p180 = scmp.lt.s32.totalorder %s21, 0
        %s181 = scalar_select %p180, %s21, 0
        %s182 = sadd.s32 %s181, %s179
        %s183 = smul.addr %s182, 8
        %s184 = scalar_lea.vmem %s0, %s183
        %p185 = scmp.lt.s32.totalorder %s20, 1
        %s186 = scalar_select %p185, %s20, 1
        %p187 = scmp.lt.s32.totalorder %s21, 0
        %s188 = scalar_select %p187, %s21, 0
        %s189 = sadd.s32 %s188, %s186
        %s190 = smul.addr %s189, 8
        %s191 = scalar_lea.vmem %s1, %s190
        %v192 = vld [vmem:[%s184] sm:$0xff]
        %v193 = vmul.f32 %v192, 4.0
        %v194 = vld [vmem:[%s191] sm:$0xff]
        %196 = vset.pattern.permute.xlu0 0
        %197 = vperm.xlu0 %196, %v193
        %v198 = vpop.permute.xlu0 %197
        %v200 = vmul.f32 %v194, %v198
        %vm201 = vcmask 261120
        %202 = vst.msk [vmem:[%s177] sm:$0xff] %vm201, %v200
        %s203 = sand.u32 %s94, 1
        %s204 = scalar_lea.sflag [#allocation3], %s203
        %s205 = sand.u32 %s94, 1
        %s206 = smul.addr %s205, 8
        %s207 = scalar_lea.vmem [#allocation2], %s206
        // Predicated region
        $region29: #{tpu_custom_call.1} parent=27 // pred_check
          %p208 = pneg %p104
        $region30: #{tpu_custom_call.1} parent=27 // pred_check_branch
          %210 = sbr.rel (%p208) target = $region32
        $region31: #{tpu_custom_call.1} parent=27 // pred_region
          %s212 = ssub.s32 128, 128
          %213 = vsyncadd %s204, %s212
          %s214 = sadd.s32 %s21, %s20
          %s215 = smul.addr %s214, 128
          %s216 = scalar_lea.hbm %s2, %s215
          %s218 = sshll.u32 %s207, 4
          %s219 = int_to_ptr.vmem [resolvable:$true] %s218
          %221 = dma.vmem_to_hbm [thread:$0]  %s219, 128, %s216, %s204
        $region32: #{tpu_custom_call.1} parent=27 // pred_fallthru
          _
      $region28: #{tpu_custom_call.1} parent=5 // pred_fallthru
        _
      %p222 = scmp.le.s32.totalorder 2, %s11
      // Predicated region
      $region33: #{tpu_custom_call.1} parent=5 // pred_check
        %p223 = pneg %p222
      $region34: #{tpu_custom_call.1} parent=5 // pred_check_branch
        %225 = sbr.rel (%p223) target = $region36
      $region35: #{tpu_custom_call.1} parent=5 // pred_region
        %s226 = ssub.s32 %s11, 2
        // Predicated region
        $region37: #{tpu_custom_call.1} parent=35 // pred_check
          %p227 = pneg %p110
        $region38: #{tpu_custom_call.1} parent=35 // pred_check_branch
          %229 = sbr.rel (%p227) target = $region40
        $region39: #{tpu_custom_call.1} parent=35 // pred_region
          %s230 = sand.u32 %s95, 1
          %s231 = scalar_lea.sflag [#allocation3], %s230
          %s232 = sand.u32 %s95, 1
          %s233 = smul.addr %s232, 8
          %s234 = scalar_lea.vmem [#allocation2], %s233
          %235 = dma.done %s231, 128
        $region40: #{tpu_custom_call.1} parent=35 // pred_fallthru
          _
      $region36: #{tpu_custom_call.1} parent=5 // pred_fallthru
        _
    $region6: #{tpu_custom_call.1} parent=1 // loop_footer
      %s15 = sadd.s32 1, %s11
    $region7: #{tpu_custom_call.1} parent=1 // loop_footer_branch
      %10 = sbr.rel target = $region3
    $region8: #{tpu_custom_call.1} parent=1 // loop_exit
      _
    %236 = vsyncpa [#allocation3], 1
    %s237 = scalar_lea.sflag [#allocation3], 1
    %238 = vsyncpa %s237, 1

</llo_original>
